<compile_context>
chip_gen: v5e
topology: v5e:2x2
jax: 0.10.0
libtpu: 0.0.40
codegen_flags: <defaults>
</compile_context>

<pallas_src>
import jax
import jax.numpy as jnp
from jax.experimental import pallas as pl
from jax.experimental.pallas import tpu as pltpu

_LANE = 128


def _round_up(n, m):
    return ((n + m - 1) // m) * m


def _dot(a, w_ref):
    # Cast the (f32) activation to the weight dtype (no-op in f32 mode,
    # bf16 MXU path in bf16 mode); always accumulate in f32.
    return jnp.dot(a.astype(w_ref.dtype), w_ref[...],
                   preferred_element_type=jnp.float32)


def _vae_kernel(x_ref, eps_ref,
                we1_ref, be1_ref, we2_ref, be2_ref,
                we3m_ref, be3m_ref, we3s_ref, be3s_ref,
                wd1_ref, bd1_ref, wd2_ref, bd2_ref, wd3_ref, bd3_ref,
                out_ref, mu_ref, sigma_ref):
    # ------------- Encoder: in_dim -> 2H -> H -> (mu | sigma) -------------
    h = jnp.maximum(_dot(x_ref[...], we1_ref) + be1_ref[...], 0.0)
    h = jnp.maximum(_dot(h, we2_ref) + be2_ref[...], 0.0)

    # Two lane-aligned head matmuls instead of chunk(2, dim=1) on a fused head.
    mu = _dot(h, we3m_ref) + be3m_ref[...]
    s_raw = _dot(h, we3s_ref) + be3s_ref[...]

    # Stable softplus: max(z, 0) + log1p(exp(-|z|))   (== F.softplus)
    sigma = 1e-06 + (jnp.maximum(s_raw, 0.0) + jnp.log1p(jnp.exp(-jnp.abs(s_raw))))

    mu_ref[...] = mu          # lane-dense (padded to 128) unmasked stores
    sigma_ref[...] = sigma

    # ------------- Reparameterization: x = mu + sigma * eps ----------------
    xz = mu + sigma * eps_ref[...]

    # ------------- Decoder: out_dim -> H -> 2H -> in_dim -------------------
    d = jnp.maximum(_dot(xz, wd1_ref) + bd1_ref[...], 0.0)
    d = jnp.maximum(_dot(d, wd2_ref) + bd2_ref[...], 0.0)
    d = _dot(d, wd3_ref) + bd3_ref[...]

    out_ref[...] = jnp.clip(d, 1e-06, 1.0 - 1e-06)


def _prepare_params(params, *, in_dim, out_dim, compute_dtype):
    """Split we3 into (mu, sigma) heads and pad output-facing lane dims to 128.

    In production this would be done once and cached; here it runs per call.
    """
    od_p = _round_up(out_dim, _LANE)
    id_p = _round_up(in_dim, _LANE)

    def pad_cols(a, n):
        return jnp.pad(a, ((0, 0), (0, n - a.shape[1])))

    def pad_rows(a, n):
        return jnp.pad(a, ((0, n - a.shape[0]), (0, 0)))

    we3, be3 = params["we3"], params["be3"]
    cd, f32 = compute_dtype, jnp.float32
    prepped = dict(
        we1=params["we1"].astype(cd), be1=params["be1"].astype(f32),
        we2=params["we2"].astype(cd), be2=params["be2"].astype(f32),
        we3m=pad_cols(we3[:, :out_dim], od_p).astype(cd),
        be3m=pad_cols(be3[:, :out_dim], od_p).astype(f32),
        we3s=pad_cols(we3[:, out_dim:], od_p).astype(cd),
        be3s=pad_cols(be3[:, out_dim:], od_p).astype(f32),
        wd1=pad_rows(params["wd1"], od_p).astype(cd),
        bd1=params["bd1"].astype(f32),
        wd2=params["wd2"].astype(cd), bd2=params["bd2"].astype(f32),
        wd3=pad_cols(params["wd3"], id_p).astype(cd),
        bd3=pad_cols(params["bd3"], id_p).astype(f32),
    )
    return prepped, od_p, id_p


def vae_forward(x, eps, params, *, out_dim,
                compute_dtype=jnp.float32, batch_tile=256):
    """Full VAE forward pass in one Pallas kernel, gridded over the batch.

    x:   (B, in_dim)  float32
    eps: (B, out_dim) float32  -- N(0,1) sample for the reparameterization
    Returns (output (B, in_dim), mu (B, out_dim), sigma (B, out_dim)), all f32.
    """
    B, in_dim = x.shape
    prepped, od_p, id_p = _prepare_params(
        params, in_dim=in_dim, out_dim=out_dim, compute_dtype=compute_dtype)

    # Zero-pad eps so mu / sigma / eps share the lane-dense padded width.
    eps_p = jnp.pad(eps, ((0, 0), (0, od_p - out_dim))).astype(jnp.float32)
    x = x.astype(compute_dtype)

    # Batch tile: whole batch for small B; otherwise a sublane-aligned tile so
    # the batch axis is software-pipelined and (on v7x) split across both TCs.
    TB = B if B <= batch_tile else batch_tile
    grid = (pl.cdiv(B, TB),)

    names = ("we1", "be1", "we2", "be2", "we3m", "be3m", "we3s", "be3s",
             "wd1", "bd1", "wd2", "bd2", "wd3", "bd3")
    w_args = tuple(prepped[n] for n in names)

    batch_map = lambda i: (i, 0)      # tiles over batch
    resident_map = lambda i: (0, 0)   # weights stay resident in VMEM

    in_specs = [pl.BlockSpec((TB, in_dim), batch_map),
                pl.BlockSpec((TB, od_p), batch_map)]
    in_specs += [pl.BlockSpec(w.shape, resident_map) for w in w_args]

    out_specs = (pl.BlockSpec((TB, id_p), batch_map),
                 pl.BlockSpec((TB, od_p), batch_map),
                 pl.BlockSpec((TB, od_p), batch_map))
    out_shape = (jax.ShapeDtypeStruct((B, id_p), jnp.float32),
                 jax.ShapeDtypeStruct((B, od_p), jnp.float32),
                 jax.ShapeDtypeStruct((B, od_p), jnp.float32))

    # Advisory cost estimate for XLA's scheduler.
    h2, h1 = prepped["we1"].shape[1], prepped["we2"].shape[1]
    mm_elems = (in_dim * h2 + h2 * h1 + 2 * h1 * od_p
                + od_p * h1 + h1 * h2 + h2 * id_p)
    cost = pl.CostEstimate(
        flops=2 * B * mm_elems,
        transcendentals=2 * B * od_p,  # exp + log1p in softplus
        bytes_accessed=(x.nbytes + eps_p.nbytes
                        + sum(a.nbytes for a in w_args)
                        + 4 * B * (id_p + 2 * od_p)))

    out_pad, mu_pad, sigma_pad = pl.pallas_call(
        _vae_kernel,
        grid=grid,
        in_specs=in_specs,
        out_specs=out_specs,
        out_shape=out_shape,
        compiler_params=pltpu.CompilerParams(dimension_semantics=("parallel",)),
        cost_estimate=cost,
    )(x, eps_p, *w_args)

    # Slice the lane-padding off, wrapper-side.
    return out_pad[:, :in_dim], mu_pad[:, :out_dim], sigma_pad[:, :out_dim]


def init_params(key, in_dim, hidden_dim, out_dim):
    """Deterministic synthetic parameters.  Weights stored as (in, out)."""
    def linear(k, fan_in, fan_out):
        kw, kb = jax.random.split(k)
        w = jax.random.normal(kw, (fan_in, fan_out), jnp.float32) * 0.1
        b = jax.random.normal(kb, (1, fan_out), jnp.float32) * 0.1
        return w, b

    keys = jax.random.split(key, 6)
    # Encoder: in_dim -> 2H -> H -> 2*out_dim
    we1, be1 = linear(keys[0], in_dim, hidden_dim * 2)
    we2, be2 = linear(keys[1], hidden_dim * 2, hidden_dim)
    we3, be3 = linear(keys[2], hidden_dim, out_dim * 2)
    # Decoder: out_dim -> H -> 2H -> in_dim
    wd1, bd1 = linear(keys[3], out_dim, hidden_dim)
    wd2, bd2 = linear(keys[4], hidden_dim, hidden_dim * 2)
    wd3, bd3 = linear(keys[5], hidden_dim * 2, in_dim)
    return dict(we1=we1, be1=be1, we2=we2, be2=be2, we3=we3, be3=be3,
                wd1=wd1, bd1=bd1, wd2=wd2, bd2=bd2, wd3=wd3, bd3=bd3)


def reference_forward(x, eps, params, *, out_dim):
    """Pure-JAX reference mirroring the PyTorch module semantics."""
    h = jax.nn.relu(x @ params["we1"] + params["be1"])
    h = jax.nn.relu(h @ params["we2"] + params["be2"])
    z = h @ params["we3"] + params["be3"]
    mu, sig_raw = z[:, :out_dim], z[:, out_dim:]
    sigma = 1e-06 + jax.nn.softplus(sig_raw)
    xz = mu + sigma * eps
    d = jax.nn.relu(xz @ params["wd1"] + params["bd1"])
    d = jax.nn.relu(d @ params["wd2"] + params["bd2"])
    d = d @ params["wd3"] + params["bd3"]
    return jnp.clip(d, 1e-06, 1.0 - 1e-06), mu, sigma


if __name__ == "__main__":
    B, IN_DIM, HIDDEN_DIM, OUT_DIM = 4, 16, 32, 8

    key = jax.random.PRNGKey(0)
    kx, keps, kp = jax.random.split(key, 3)

    x = jax.random.normal(kx, (B, IN_DIM), jnp.float32)
    # TODO(synk): PyTorch samples Normal(0,1) inside forward; here the noise is
    # sampled wrapper-side (jax.random) and passed in as an explicit input.
    eps = jax.random.normal(keps, (B, OUT_DIM), jnp.float32)
    params = init_params(kp, IN_DIM, HIDDEN_DIM, OUT_DIM)

    # f32 path: tight check against the pure-JAX reference.
    out, mu, sigma = vae_forward(x, eps, params, out_dim=OUT_DIM)
    jax.block_until_ready((out, mu, sigma))

    ref_out, ref_mu, ref_sigma = reference_forward(x, eps, params, out_dim=OUT_DIM)
    assert out.shape == (B, IN_DIM) and mu.shape == (B, OUT_DIM) and sigma.shape == (B, OUT_DIM)
    assert jnp.allclose(out, ref_out, atol=1e-5)
    assert jnp.allclose(mu, ref_mu, atol=1e-5)
    assert jnp.allclose(sigma, ref_sigma, atol=1e-5)

    # bf16 weight path (f32 accumulation, f32 elementwise epilogue): loose check.
    out_bf, mu_bf, sigma_bf = vae_forward(x, eps, params, out_dim=OUT_DIM,
                                          compute_dtype=jnp.bfloat16)
    jax.block_until_ready((out_bf, mu_bf, sigma_bf))
    assert jnp.allclose(out_bf, ref_out, atol=5e-2)
    assert jnp.allclose(mu_bf, ref_mu, atol=5e-2)
    assert jnp.allclose(sigma_bf, ref_sigma, atol=5e-2)

    print("KERNEL_OK")
</pallas_src>

<mosaic_0001>
module attributes {stable_mosaic.version = 11 : i64} {
  func.func @_vae_kernel(%arg0: i32, %arg1: memref<4x16xf32, #tpu.memory_space<vmem>>, %arg2: memref<4x128xf32, #tpu.memory_space<vmem>>, %arg3: memref<16x64xf32, #tpu.memory_space<vmem>>, %arg4: memref<1x64xf32, #tpu.memory_space<vmem>>, %arg5: memref<64x32xf32, #tpu.memory_space<vmem>>, %arg6: memref<1x32xf32, #tpu.memory_space<vmem>>, %arg7: memref<32x128xf32, #tpu.memory_space<vmem>>, %arg8: memref<1x128xf32, #tpu.memory_space<vmem>>, %arg9: memref<32x128xf32, #tpu.memory_space<vmem>>, %arg10: memref<1x128xf32, #tpu.memory_space<vmem>>, %arg11: memref<128x32xf32, #tpu.memory_space<vmem>>, %arg12: memref<1x32xf32, #tpu.memory_space<vmem>>, %arg13: memref<32x64xf32, #tpu.memory_space<vmem>>, %arg14: memref<1x64xf32, #tpu.memory_space<vmem>>, %arg15: memref<64x128xf32, #tpu.memory_space<vmem>>, %arg16: memref<1x128xf32, #tpu.memory_space<vmem>>, %arg17: memref<4x128xf32, #tpu.memory_space<vmem>>, %arg18: memref<4x128xf32, #tpu.memory_space<vmem>>, %arg19: memref<4x128xf32, #tpu.memory_space<vmem>>) attributes {dimension_semantics = [#tpu.dimension_semantics<parallel>], iteration_bounds = array<i64: 1>, scalar_prefetch = 0 : i64, scratch_operands = 0 : i64, tpu.core_type = #tpu.core_type<tc>, window_params = [{transform_indices = @transform_0, window_bounds = array<i64: 4, 16>}, {transform_indices = @transform_1, window_bounds = array<i64: 4, 128>}, {pipeline_mode = #tpu.pipeline_mode<synchronous>, transform_indices = @transform_2, window_bounds = array<i64: 16, 64>}, {pipeline_mode = #tpu.pipeline_mode<synchronous>, transform_indices = @transform_3, window_bounds = array<i64: 1, 64>}, {pipeline_mode = #tpu.pipeline_mode<synchronous>, transform_indices = @transform_4, window_bounds = array<i64: 64, 32>}, {pipeline_mode = #tpu.pipeline_mode<synchronous>, transform_indices = @transform_5, window_bounds = array<i64: 1, 32>}, {pipeline_mode = #tpu.pipeline_mode<synchronous>, transform_indices = @transform_6, window_bounds = array<i64: 32, 128>}, {pipeline_mode = #tpu.pipeline_mode<synchronous>, transform_indices = @transform_7, window_bounds = array<i64: 1, 128>}, {pipeline_mode = #tpu.pipeline_mode<synchronous>, transform_indices = @transform_8, window_bounds = array<i64: 32, 128>}, {pipeline_mode = #tpu.pipeline_mode<synchronous>, transform_indices = @transform_9, window_bounds = array<i64: 1, 128>}, {pipeline_mode = #tpu.pipeline_mode<synchronous>, transform_indices = @transform_10, window_bounds = array<i64: 128, 32>}, {pipeline_mode = #tpu.pipeline_mode<synchronous>, transform_indices = @transform_11, window_bounds = array<i64: 1, 32>}, {pipeline_mode = #tpu.pipeline_mode<synchronous>, transform_indices = @transform_12, window_bounds = array<i64: 32, 64>}, {pipeline_mode = #tpu.pipeline_mode<synchronous>, transform_indices = @transform_13, window_bounds = array<i64: 1, 64>}, {pipeline_mode = #tpu.pipeline_mode<synchronous>, transform_indices = @transform_14, window_bounds = array<i64: 64, 128>}, {pipeline_mode = #tpu.pipeline_mode<synchronous>, transform_indices = @transform_15, window_bounds = array<i64: 1, 128>}, {transform_indices = @transform_16, window_bounds = array<i64: 4, 128>}, {transform_indices = @transform_17, window_bounds = array<i64: 4, 128>}, {transform_indices = @transform_18, window_bounds = array<i64: 4, 128>}]} {
    %c0 = arith.constant 0 : index
    %c0_0 = arith.constant 0 : index
    %0 = vector.load %arg1[%c0, %c0_0] : memref<4x16xf32, #tpu.memory_space<vmem>>, vector<4x16xf32>
    %c0_1 = arith.constant 0 : index
    %c0_2 = arith.constant 0 : index
    %1 = vector.load %arg3[%c0_1, %c0_2] : memref<16x64xf32, #tpu.memory_space<vmem>>, vector<16x64xf32>
    %cst = arith.constant dense<0.000000e+00> : vector<4x64xf32>
    %2 = tpu.matmul %0, %1, %cst {dimension_numbers = #tpu.dot_dimension_numbers<[1], [0], [0], [1], [0, 0, 1, 1], [], []>} : vector<4x16xf32>, vector<16x64xf32>, vector<4x64xf32> -> vector<4x64xf32>
    %c0_3 = arith.constant 0 : index
    %c0_4 = arith.constant 0 : index
    %3 = vector.load %arg4[%c0_3, %c0_4] : memref<1x64xf32, #tpu.memory_space<vmem>>, vector<1x64xf32>
    %4 = vector.broadcast %3 : vector<1x64xf32> to vector<4x64xf32>
    %5 = arith.addf %2, %4 : vector<4x64xf32>
    %cst_5 = arith.constant 0.000000e+00 : f32
    %6 = vector.broadcast %cst_5 : f32 to vector<4x64xf32>
    %7 = arith.maximumf %5, %6 : vector<4x64xf32>
    %c0_6 = arith.constant 0 : index
    %c0_7 = arith.constant 0 : index
    %8 = vector.load %arg5[%c0_6, %c0_7] : memref<64x32xf32, #tpu.memory_space<vmem>>, vector<64x32xf32>
    %cst_8 = arith.constant dense<0.000000e+00> : vector<4x32xf32>
    %9 = tpu.matmul %7, %8, %cst_8 {dimension_numbers = #tpu.dot_dimension_numbers<[1], [0], [0], [1], [0, 0, 1, 1], [], []>} : vector<4x64xf32>, vector<64x32xf32>, vector<4x32xf32> -> vector<4x32xf32>
    %c0_9 = arith.constant 0 : index
    %c0_10 = arith.constant 0 : index
    %10 = vector.load %arg6[%c0_9, %c0_10] : memref<1x32xf32, #tpu.memory_space<vmem>>, vector<1x32xf32>
    %11 = vector.broadcast %10 : vector<1x32xf32> to vector<4x32xf32>
    %12 = arith.addf %9, %11 : vector<4x32xf32>
    %cst_11 = arith.constant 0.000000e+00 : f32
    %13 = vector.broadcast %cst_11 : f32 to vector<4x32xf32>
    %14 = arith.maximumf %12, %13 : vector<4x32xf32>
    %c0_12 = arith.constant 0 : index
    %c0_13 = arith.constant 0 : index
    %15 = vector.load %arg7[%c0_12, %c0_13] : memref<32x128xf32, #tpu.memory_space<vmem>>, vector<32x128xf32>
    %cst_14 = arith.constant dense<0.000000e+00> : vector<4x128xf32>
    %16 = tpu.matmul %14, %15, %cst_14 {dimension_numbers = #tpu.dot_dimension_numbers<[1], [0], [0], [1], [0, 0, 1, 1], [], []>} : vector<4x32xf32>, vector<32x128xf32>, vector<4x128xf32> -> vector<4x128xf32>
    %c0_15 = arith.constant 0 : index
    %c0_16 = arith.constant 0 : index
    %17 = vector.load %arg8[%c0_15, %c0_16] : memref<1x128xf32, #tpu.memory_space<vmem>>, vector<1x128xf32>
    %18 = vector.broadcast %17 : vector<1x128xf32> to vector<4x128xf32>
    %19 = arith.addf %16, %18 : vector<4x128xf32>
    %c0_17 = arith.constant 0 : index
    %c0_18 = arith.constant 0 : index
    %20 = vector.load %arg9[%c0_17, %c0_18] : memref<32x128xf32, #tpu.memory_space<vmem>>, vector<32x128xf32>
    %cst_19 = arith.constant dense<0.000000e+00> : vector<4x128xf32>
    %21 = tpu.matmul %14, %20, %cst_19 {dimension_numbers = #tpu.dot_dimension_numbers<[1], [0], [0], [1], [0, 0, 1, 1], [], []>} : vector<4x32xf32>, vector<32x128xf32>, vector<4x128xf32> -> vector<4x128xf32>
    %c0_20 = arith.constant 0 : index
    %c0_21 = arith.constant 0 : index
    %22 = vector.load %arg10[%c0_20, %c0_21] : memref<1x128xf32, #tpu.memory_space<vmem>>, vector<1x128xf32>
    %23 = vector.broadcast %22 : vector<1x128xf32> to vector<4x128xf32>
    %24 = arith.addf %21, %23 : vector<4x128xf32>
    %cst_22 = arith.constant 0.000000e+00 : f32
    %25 = vector.broadcast %cst_22 : f32 to vector<4x128xf32>
    %26 = arith.maximumf %24, %25 : vector<4x128xf32>
    %27 = math.absf %24 : vector<4x128xf32>
    %cst_23 = arith.constant 0.000000e+00 : f32
    %28 = vector.broadcast %cst_23 : f32 to vector<4x128xf32>
    %29 = arith.subf %28, %27 : vector<4x128xf32>
    %30 = math.exp %29 : vector<4x128xf32>
    %31 = math.log1p %30 : vector<4x128xf32>
    %32 = arith.addf %26, %31 : vector<4x128xf32>
    %cst_24 = arith.constant 9.99999997E-7 : f32
    %33 = vector.broadcast %cst_24 : f32 to vector<4x128xf32>
    %34 = arith.addf %33, %32 : vector<4x128xf32>
    %c0_25 = arith.constant 0 : index
    %c0_26 = arith.constant 0 : index
    %35 = vector.load %arg18[%c0_25, %c0_26] : memref<4x128xf32, #tpu.memory_space<vmem>>, vector<4x128xf32>
    tpu.vector_store %arg18[%c0_25, %c0_26], %19 {strides = array<i32>} : memref<4x128xf32, #tpu.memory_space<vmem>>, vector<4x128xf32>,
    %c0_27 = arith.constant 0 : index
    %c0_28 = arith.constant 0 : index
    %36 = vector.load %arg19[%c0_27, %c0_28] : memref<4x128xf32, #tpu.memory_space<vmem>>, vector<4x128xf32>
    tpu.vector_store %arg19[%c0_27, %c0_28], %34 {strides = array<i32>} : memref<4x128xf32, #tpu.memory_space<vmem>>, vector<4x128xf32>,
    %c0_29 = arith.constant 0 : index
    %c0_30 = arith.constant 0 : index
    %37 = vector.load %arg2[%c0_29, %c0_30] : memref<4x128xf32, #tpu.memory_space<vmem>>, vector<4x128xf32>
    %38 = arith.mulf %34, %37 : vector<4x128xf32>
    %39 = arith.addf %19, %38 : vector<4x128xf32>
    %c0_31 = arith.constant 0 : index
    %c0_32 = arith.constant 0 : index
    %40 = vector.load %arg11[%c0_31, %c0_32] : memref<128x32xf32, #tpu.memory_space<vmem>>, vector<128x32xf32>
    %cst_33 = arith.constant dense<0.000000e+00> : vector<4x32xf32>
    %41 = tpu.matmul %39, %40, %cst_33 {dimension_numbers = #tpu.dot_dimension_numbers<[1], [0], [0], [1], [0, 0, 1, 1], [], []>} : vector<4x128xf32>, vector<128x32xf32>, vector<4x32xf32> -> vector<4x32xf32>
    %c0_34 = arith.constant 0 : index
    %c0_35 = arith.constant 0 : index
    %42 = vector.load %arg12[%c0_34, %c0_35] : memref<1x32xf32, #tpu.memory_space<vmem>>, vector<1x32xf32>
    %43 = vector.broadcast %42 : vector<1x32xf32> to vector<4x32xf32>
    %44 = arith.addf %41, %43 : vector<4x32xf32>
    %cst_36 = arith.constant 0.000000e+00 : f32
    %45 = vector.broadcast %cst_36 : f32 to vector<4x32xf32>
    %46 = arith.maximumf %44, %45 : vector<4x32xf32>
    %c0_37 = arith.constant 0 : index
    %c0_38 = arith.constant 0 : index
    %47 = vector.load %arg13[%c0_37, %c0_38] : memref<32x64xf32, #tpu.memory_space<vmem>>, vector<32x64xf32>
    %cst_39 = arith.constant dense<0.000000e+00> : vector<4x64xf32>
    %48 = tpu.matmul %46, %47, %cst_39 {dimension_numbers = #tpu.dot_dimension_numbers<[1], [0], [0], [1], [0, 0, 1, 1], [], []>} : vector<4x32xf32>, vector<32x64xf32>, vector<4x64xf32> -> vector<4x64xf32>
    %c0_40 = arith.constant 0 : index
    %c0_41 = arith.constant 0 : index
    %49 = vector.load %arg14[%c0_40, %c0_41] : memref<1x64xf32, #tpu.memory_space<vmem>>, vector<1x64xf32>
    %50 = vector.broadcast %49 : vector<1x64xf32> to vector<4x64xf32>
    %51 = arith.addf %48, %50 : vector<4x64xf32>
    %cst_42 = arith.constant 0.000000e+00 : f32
    %52 = vector.broadcast %cst_42 : f32 to vector<4x64xf32>
    %53 = arith.maximumf %51, %52 : vector<4x64xf32>
    %c0_43 = arith.constant 0 : index
    %c0_44 = arith.constant 0 : index
    %54 = vector.load %arg15[%c0_43, %c0_44] : memref<64x128xf32, #tpu.memory_space<vmem>>, vector<64x128xf32>
    %cst_45 = arith.constant dense<0.000000e+00> : vector<4x128xf32>
    %55 = tpu.matmul %53, %54, %cst_45 {dimension_numbers = #tpu.dot_dimension_numbers<[1], [0], [0], [1], [0, 0, 1, 1], [], []>} : vector<4x64xf32>, vector<64x128xf32>, vector<4x128xf32> -> vector<4x128xf32>
    %c0_46 = arith.constant 0 : index
    %c0_47 = arith.constant 0 : index
    %56 = vector.load %arg16[%c0_46, %c0_47] : memref<1x128xf32, #tpu.memory_space<vmem>>, vector<1x128xf32>
    %57 = vector.broadcast %56 : vector<1x128xf32> to vector<4x128xf32>
    %58 = arith.addf %55, %57 : vector<4x128xf32>
    %cst_48 = arith.constant 9.99999997E-7 : f32
    %cst_49 = arith.constant 0.999998986 : f32
    %59 = vector.broadcast %cst_48 : f32 to vector<4x128xf32>
    %60 = arith.maximumf %59, %58 : vector<4x128xf32>
    %61 = vector.broadcast %cst_49 : f32 to vector<4x128xf32>
    %62 = arith.minimumf %61, %60 : vector<4x128xf32>
    %c0_50 = arith.constant 0 : index
    %c0_51 = arith.constant 0 : index
    %63 = vector.load %arg17[%c0_50, %c0_51] : memref<4x128xf32, #tpu.memory_space<vmem>>, vector<4x128xf32>
    tpu.vector_store %arg17[%c0_50, %c0_51], %62 {strides = array<i32>} : memref<4x128xf32, #tpu.memory_space<vmem>>, vector<4x128xf32>,
    return
  }
  func.func @transform_0(%arg0: i32) -> (i32, i32) {
    %c0_i32 = arith.constant 0 : i32
    %c0_i32_0 = arith.constant 0 : i32
    return %arg0, %c0_i32 : i32, i32
  }
  func.func @transform_1(%arg0: i32) -> (i32, i32) {
    %c0_i32 = arith.constant 0 : i32
    %c0_i32_0 = arith.constant 0 : i32
    return %arg0, %c0_i32 : i32, i32
  }
  func.func @transform_2(%arg0: i32) -> (i32, i32) {
    %c0_i32 = arith.constant 0 : i32
    %c0_i32_0 = arith.constant 0 : i32
    %c0_i32_1 = arith.constant 0 : i32
    return %c0_i32, %c0_i32_0 : i32, i32
  }
  func.func @transform_3(%arg0: i32) -> (i32, i32) {
    %c0_i32 = arith.constant 0 : i32
    %c0_i32_0 = arith.constant 0 : i32
    %c0_i32_1 = arith.constant 0 : i32
    return %c0_i32, %c0_i32_0 : i32, i32
  }
  func.func @transform_4(%arg0: i32) -> (i32, i32) {
    %c0_i32 = arith.constant 0 : i32
    %c0_i32_0 = arith.constant 0 : i32
    %c0_i32_1 = arith.constant 0 : i32
    return %c0_i32, %c0_i32_0 : i32, i32
  }
  func.func @transform_5(%arg0: i32) -> (i32, i32) {
    %c0_i32 = arith.constant 0 : i32
    %c0_i32_0 = arith.constant 0 : i32
    %c0_i32_1 = arith.constant 0 : i32
    return %c0_i32, %c0_i32_0 : i32, i32
  }
  func.func @transform_6(%arg0: i32) -> (i32, i32) {
    %c0_i32 = arith.constant 0 : i32
    %c0_i32_0 = arith.constant 0 : i32
    %c0_i32_1 = arith.constant 0 : i32
    return %c0_i32, %c0_i32_0 : i32, i32
  }
  func.func @transform_7(%arg0: i32) -> (i32, i32) {
    %c0_i32 = arith.constant 0 : i32
    %c0_i32_0 = arith.constant 0 : i32
    %c0_i32_1 = arith.constant 0 : i32
    return %c0_i32, %c0_i32_0 : i32, i32
  }
  func.func @transform_8(%arg0: i32) -> (i32, i32) {
    %c0_i32 = arith.constant 0 : i32
    %c0_i32_0 = arith.constant 0 : i32
    %c0_i32_1 = arith.constant 0 : i32
    return %c0_i32, %c0_i32_0 : i32, i32
  }
  func.func @transform_9(%arg0: i32) -> (i32, i32) {
    %c0_i32 = arith.constant 0 : i32
    %c0_i32_0 = arith.constant 0 : i32
    %c0_i32_1 = arith.constant 0 : i32
    return %c0_i32, %c0_i32_0 : i32, i32
  }
  func.func @transform_10(%arg0: i32) -> (i32, i32) {
    %c0_i32 = arith.constant 0 : i32
    %c0_i32_0 = arith.constant 0 : i32
    %c0_i32_1 = arith.constant 0 : i32
    return %c0_i32, %c0_i32_0 : i32, i32
  }
  func.func @transform_11(%arg0: i32) -> (i32, i32) {
    %c0_i32 = arith.constant 0 : i32
    %c0_i32_0 = arith.constant 0 : i32
    %c0_i32_1 = arith.constant 0 : i32
    return %c0_i32, %c0_i32_0 : i32, i32
  }
  func.func @transform_12(%arg0: i32) -> (i32, i32) {
    %c0_i32 = arith.constant 0 : i32
    %c0_i32_0 = arith.constant 0 : i32
    %c0_i32_1 = arith.constant 0 : i32
    return %c0_i32, %c0_i32_0 : i32, i32
  }
  func.func @transform_13(%arg0: i32) -> (i32, i32) {
    %c0_i32 = arith.constant 0 : i32
    %c0_i32_0 = arith.constant 0 : i32
    %c0_i32_1 = arith.constant 0 : i32
    return %c0_i32, %c0_i32_0 : i32, i32
  }
  func.func @transform_14(%arg0: i32) -> (i32, i32) {
    %c0_i32 = arith.constant 0 : i32
    %c0_i32_0 = arith.constant 0 : i32
    %c0_i32_1 = arith.constant 0 : i32
    return %c0_i32, %c0_i32_0 : i32, i32
  }
  func.func @transform_15(%arg0: i32) -> (i32, i32) {
    %c0_i32 = arith.constant 0 : i32
    %c0_i32_0 = arith.constant 0 : i32
    %c0_i32_1 = arith.constant 0 : i32
    return %c0_i32, %c0_i32_0 : i32, i32
  }
  func.func @transform_16(%arg0: i32) -> (i32, i32) {
    %c0_i32 = arith.constant 0 : i32
    %c0_i32_0 = arith.constant 0 : i32
    return %arg0, %c0_i32 : i32, i32
  }
  func.func @transform_17(%arg0: i32) -> (i32, i32) {
    %c0_i32 = arith.constant 0 : i32
    %c0_i32_0 = arith.constant 0 : i32
    return %arg0, %c0_i32 : i32, i32
  }
  func.func @transform_18(%arg0: i32) -> (i32, i32) {
    %c0_i32 = arith.constant 0 : i32
    %c0_i32_0 = arith.constant 0 : i32
    return %arg0, %c0_i32 : i32, i32
  }
}

</mosaic_0001>

<llo_original>
// kernel: tpu_custom_call.1
$region0: #{tpu_custom_call.1}
  #allocation0 [shape = 'u32[]', space=smem, size = 0x4, offset = 0x4, fixed_abs, tag = 'smem constant byte address 0x4 - core index']
  #allocation1 [shape = 'u32[72,128]{1,0:T(1,128)}', space=vmem, size = 0x9000, scoped, tag = 'internal scratch']
  %s0 = inlined_call_operand.vmem [shape: f32[4,16], index: 0, kind: input, shape index: {}]
  %s1 = inlined_call_operand.vmem [shape: f32[4,128], index: 1, kind: input, shape index: {}]
  %s2 = inlined_call_operand.vmem [shape: f32[16,64], index: 2, kind: input, shape index: {}]
  %s3 = inlined_call_operand.vmem [shape: f32[1,64], index: 3, kind: input, shape index: {}]
  %s4 = inlined_call_operand.vmem [shape: f32[64,32], index: 4, kind: input, shape index: {}]
  %s5 = inlined_call_operand.vmem [shape: f32[1,32], index: 5, kind: input, shape index: {}]
  %s6 = inlined_call_operand.vmem [shape: f32[32,128], index: 6, kind: input, shape index: {}]
  %s7 = inlined_call_operand.vmem [shape: f32[1,128], index: 7, kind: input, shape index: {}]
  %s8 = inlined_call_operand.vmem [shape: f32[32,128], index: 8, kind: input, shape index: {}]
  %s9 = inlined_call_operand.vmem [shape: f32[1,128], index: 9, kind: input, shape index: {}]
  %s10 = inlined_call_operand.vmem [shape: f32[128,32], index: 10, kind: input, shape index: {}]
  %s11 = inlined_call_operand.vmem [shape: f32[1,32], index: 11, kind: input, shape index: {}]
  %s12 = inlined_call_operand.vmem [shape: f32[32,64], index: 12, kind: input, shape index: {}]
  %s13 = inlined_call_operand.vmem [shape: f32[1,64], index: 13, kind: input, shape index: {}]
  %s14 = inlined_call_operand.vmem [shape: f32[64,128], index: 14, kind: input, shape index: {}]
  %s15 = inlined_call_operand.vmem [shape: f32[1,128], index: 15, kind: input, shape index: {}]
  %s16 = inlined_call_operand.hbm [shape: f32[4,128], index: 16, kind: output, shape index: {0}]
  %s17 = inlined_call_operand.hbm [shape: f32[4,128], index: 17, kind: output, shape index: {1}]
  %s18 = inlined_call_operand.hbm [shape: f32[4,128], index: 18, kind: output, shape index: {2}]
  %19 = xla_tuple %s16, %s17, %s18
  %s20 = sld [smem:[#allocation0]]
  $region90: #{tpu_custom_call.1} parent=0
    _
  %s22 = ssub.s32 1, %s20
  %s23 = scalar_select 0, %s22, %s20
  $region1: #{tpu_custom_call.1} parent=0
    #allocation2 [shape = 'u8[2048]{0}', space=vmem, size = 0x800, scoped, tag = 'output window, operand 0, single buffered']
    #allocation3 [shape = 's32[1]{0}', space=sflag, size = 0x4, scoped, tag = 'scoped memory for tpu_custom_call.1']
    #allocation4 [shape = 'u8[2048]{0}', space=vmem, size = 0x800, scoped, tag = 'output window, operand 1, single buffered']
    #allocation5 [shape = 's32[1]{0}', space=sflag, size = 0x4, scoped, tag = 'scoped memory for tpu_custom_call.1']
    #allocation6 [shape = 'u8[2048]{0}', space=vmem, size = 0x800, scoped, tag = 'output window, operand 2, single buffered']
    %24 = vsyncpa [#allocation3], 0
    %25 = vsyncpa [#allocation5], 0
    // Predicated region
    $region2: #{tpu_custom_call.1} parent=1 // pred_check
      _
    $region3: #{tpu_custom_call.1} parent=1 // pred_check_branch
      %27 = sbr.rel (0) target = $region5
    $region4: #{tpu_custom_call.1} parent=1 // pred_region
      _
    $region5: #{tpu_custom_call.1} parent=1 // pred_fallthru
      _
    // Predicated region
    $region6: #{tpu_custom_call.1} parent=1 // pred_check
      _
    $region7: #{tpu_custom_call.1} parent=1 // pred_check_branch
      %29 = sbr.rel (0) target = $region9
    $region8: #{tpu_custom_call.1} parent=1 // pred_region
      _
    $region9: #{tpu_custom_call.1} parent=1 // pred_fallthru
      _
    // Predicated region
    $region10: #{tpu_custom_call.1} parent=1 // pred_check
      _
    $region11: #{tpu_custom_call.1} parent=1 // pred_check_branch
      %31 = sbr.rel (0) target = $region13
    $region12: #{tpu_custom_call.1} parent=1 // pred_region
      _
    $region13: #{tpu_custom_call.1} parent=1 // pred_fallthru
      _
    // Predicated region
    $region14: #{tpu_custom_call.1} parent=1 // pred_check
      _
    $region15: #{tpu_custom_call.1} parent=1 // pred_check_branch
      %33 = sbr.rel (0) target = $region17
    $region16: #{tpu_custom_call.1} parent=1 // pred_region
      _
    $region17: #{tpu_custom_call.1} parent=1 // pred_fallthru
      _
    // Predicated region
    $region18: #{tpu_custom_call.1} parent=1 // pred_check
      _
    $region19: #{tpu_custom_call.1} parent=1 // pred_check_branch
      %35 = sbr.rel (0) target = $region21
    $region20: #{tpu_custom_call.1} parent=1 // pred_region
      _
    $region21: #{tpu_custom_call.1} parent=1 // pred_fallthru
      _
    // Predicated region
    $region22: #{tpu_custom_call.1} parent=1 // pred_check
      _
    $region23: #{tpu_custom_call.1} parent=1 // pred_check_branch
      %37 = sbr.rel (0) target = $region25
    $region24: #{tpu_custom_call.1} parent=1 // pred_region
      _
    $region25: #{tpu_custom_call.1} parent=1 // pred_fallthru
      _
    // Predicated region
    $region26: #{tpu_custom_call.1} parent=1 // pred_check
      _
    $region27: #{tpu_custom_call.1} parent=1 // pred_check_branch
      %39 = sbr.rel (0) target = $region29
    $region28: #{tpu_custom_call.1} parent=1 // pred_region
      _
    $region29: #{tpu_custom_call.1} parent=1 // pred_fallthru
      _
    // Predicated region
    $region30: #{tpu_custom_call.1} parent=1 // pred_check
      _
    $region31: #{tpu_custom_call.1} parent=1 // pred_check_branch
      %41 = sbr.rel (0) target = $region33
    $region32: #{tpu_custom_call.1} parent=1 // pred_region
      _
    $region33: #{tpu_custom_call.1} parent=1 // pred_fallthru
      _
    // Predicated region
    $region34: #{tpu_custom_call.1} parent=1 // pred_check
      _
    $region35: #{tpu_custom_call.1} parent=1 // pred_check_branch
      %43 = sbr.rel (0) target = $region37
    $region36: #{tpu_custom_call.1} parent=1 // pred_region
      _
    $region37: #{tpu_custom_call.1} parent=1 // pred_fallthru
      _
    // Predicated region
    $region38: #{tpu_custom_call.1} parent=1 // pred_check
      _
    $region39: #{tpu_custom_call.1} parent=1 // pred_check_branch
      %45 = sbr.rel (0) target = $region41
    $region40: #{tpu_custom_call.1} parent=1 // pred_region
      _
    $region41: #{tpu_custom_call.1} parent=1 // pred_fallthru
      _
    // Predicated region
    $region42: #{tpu_custom_call.1} parent=1 // pred_check
      _
    $region43: #{tpu_custom_call.1} parent=1 // pred_check_branch
      %47 = sbr.rel (0) target = $region45
    $region44: #{tpu_custom_call.1} parent=1 // pred_region
      _
    $region45: #{tpu_custom_call.1} parent=1 // pred_fallthru
      _
    // Predicated region
    $region46: #{tpu_custom_call.1} parent=1 // pred_check
      _
    $region47: #{tpu_custom_call.1} parent=1 // pred_check_branch
      %49 = sbr.rel (0) target = $region49
    $region48: #{tpu_custom_call.1} parent=1 // pred_region
      _
    $region49: #{tpu_custom_call.1} parent=1 // pred_fallthru
      _
    // Predicated region
    $region50: #{tpu_custom_call.1} parent=1 // pred_check
      _
    $region51: #{tpu_custom_call.1} parent=1 // pred_check_branch
      %51 = sbr.rel (0) target = $region53
    $region52: #{tpu_custom_call.1} parent=1 // pred_region
      _
    $region53: #{tpu_custom_call.1} parent=1 // pred_fallthru
      _
    // Predicated region
    $region54: #{tpu_custom_call.1} parent=1 // pred_check
      _
    $region55: #{tpu_custom_call.1} parent=1 // pred_check_branch
      %53 = sbr.rel (0) target = $region57
    $region56: #{tpu_custom_call.1} parent=1 // pred_region
      _
    $region57: #{tpu_custom_call.1} parent=1 // pred_fallthru
      _
    // Predicated region
    $region58: #{tpu_custom_call.1} parent=1 // pred_check
      _
    $region59: #{tpu_custom_call.1} parent=1 // pred_check_branch
      %55 = sbr.rel (0) target = $region61
    $region60: #{tpu_custom_call.1} parent=1 // pred_region
      _
    $region61: #{tpu_custom_call.1} parent=1 // pred_fallthru
      _
    // Predicated region
    $region62: #{tpu_custom_call.1} parent=1 // pred_check
      _
    $region63: #{tpu_custom_call.1} parent=1 // pred_check_branch
      %57 = sbr.rel (0) target = $region65
    $region64: #{tpu_custom_call.1} parent=1 // pred_region
      _
    $region65: #{tpu_custom_call.1} parent=1 // pred_fallthru
      _
    %v58 = vld [vmem:[%s0] sm:$0xf]
    %v59 = vld [vmem:[%s2] sm:$0xff]
    %v60 = vld [vmem:[%s2 + $0x8] sm:$0xff]
    %v61 = vld [vmem:[%s3] sm:$0x1]
    %v63 = vperm.slane %v61, 0
    %vm65 = vcmask 130048
    %v67 = vsel %vm65, %v58, 0
    %69 = vmatpush.msra.mxu0 0.0
    %70 = vmatpush.msra.mxu0 0.0
    %71 = vmatpush.msra.mxu0 0.0
    %72 = vmatpush.msra.mxu0 0.0
    %73 = vmatpush.msra.mxu0 0.0
    %74 = vmatpush.msra.mxu0 0.0
    %75 = vmatpush.msra.mxu0 0.0
    %76 = vmatpush.msra.mxu0 0.0
    %77 = vmatpush.msra.mxu0 0.0
    %78 = vmatpush.msra.mxu0 0.0
    %79 = vmatpush.msra.mxu0 0.0
    %80 = vmatpush.msra.mxu0 0.0
    %81 = vmatpush.msra.mxu0 0.0
    %82 = vmatpush.msra.mxu0 0.0
    %83 = vmatpush.msra.mxu0 %v60
    %84 = vmatpush.msra.mxu0 %v59
    %85 = vmatmul.f32.gmra.mxu0 %v67
    %v86 = vpop.f32.mrf.mxu0
    %v87 = vadd.f32 %v63, %v86
    %88 = vdwg.mxu0
    %v89 = vmax.f32 %v87, 0.0
    %v90 = vld [vmem:[%s4] sm:$0xff]
    %v91 = vld [vmem:[%s4 + $0x8] sm:$0xff]
    %v92 = vld [vmem:[%s4 + $0x10] sm:$0xff]
    %v93 = vld [vmem:[%s4 + $0x18] sm:$0xff]
    %v94 = vld [vmem:[%s4 + $0x20] sm:$0xff]
    %v95 = vld [vmem:[%s4 + $0x28] sm:$0xff]
    %v96 = vld [vmem:[%s4 + $0x30] sm:$0xff]
    %v97 = vld [vmem:[%s4 + $0x38] sm:$0xff]
    %v98 = vld [vmem:[%s5] sm:$0x1]
    %v100 = vperm.slane %v98, 0
    %vm102 = vcmask 523264
    %v104 = vsel %vm102, %v89, 0
    %106 = vmatpush.msra.mxu0 0.0
    %107 = vmatpush.msra.mxu0 0.0
    %108 = vmatpush.msra.mxu0 0.0
    %109 = vmatpush.msra.mxu0 0.0
    %110 = vmatpush.msra.mxu0 0.0
    %111 = vmatpush.msra.mxu0 0.0
    %112 = vmatpush.msra.mxu0 0.0
    %113 = vmatpush.msra.mxu0 0.0
    %114 = vmatpush.msra.mxu0 %v97
    %115 = vmatpush.msra.mxu0 %v96
    %116 = vmatpush.msra.mxu0 %v95
    %117 = vmatpush.msra.mxu0 %v94
    %118 = vmatpush.msra.mxu0 %v93
    %119 = vmatpush.msra.mxu0 %v92
    %120 = vmatpush.msra.mxu0 %v91
    %121 = vmatpush.msra.mxu0 %v90
    %122 = vmatmul.f32.gmra.mxu0 %v104
    %v123 = vpop.f32.mrf.mxu0
    %v124 = vadd.f32 %v100, %v123
    %125 = vdwg.mxu0
    %v126 = vmax.f32 %v124, 0.0
    %v127 = vld [vmem:[%s6] sm:$0xff]
    %v128 = vld [vmem:[%s6 + $0x8] sm:$0xff]
    %v129 = vld [vmem:[%s6 + $0x10] sm:$0xff]
    %v130 = vld [vmem:[%s6 + $0x18] sm:$0xff]
    %v131 = vld [vmem:[%s7] sm:$0x1]
    %v133 = vperm.slane %v131, 0
    %vm135 = vcmask 261120
    %v137 = vsel %vm135, %v126, 0
    %139 = vmatpush.msra.mxu0 0.0
    %140 = vmatpush.msra.mxu0 0.0
    %141 = vmatpush.msra.mxu0 0.0
    %142 = vmatpush.msra.mxu0 0.0
    %143 = vmatpush.msra.mxu0 0.0
    %144 = vmatpush.msra.mxu0 0.0
    %145 = vmatpush.msra.mxu0 0.0
    %146 = vmatpush.msra.mxu0 0.0
    %147 = vmatpush.msra.mxu0 0.0
    %148 = vmatpush.msra.mxu0 0.0
    %149 = vmatpush.msra.mxu0 0.0
    %150 = vmatpush.msra.mxu0 0.0
    %151 = vmatpush.msra.mxu0 %v130
    %152 = vmatpush.msra.mxu0 %v129
    %153 = vmatpush.msra.mxu0 %v128
    %154 = vmatpush.msra.mxu0 %v127
    %155 = vmatmul.f32.gmra.mxu0 %v137
    %v156 = vpop.f32.mrf.mxu0
    %v157 = vadd.f32 %v133, %v156
    %158 = vdwg.mxu0
    %v159 = vld [vmem:[%s8] sm:$0xff]
    %v160 = vld [vmem:[%s8 + $0x8] sm:$0xff]
    %v161 = vld [vmem:[%s8 + $0x10] sm:$0xff]
    %v162 = vld [vmem:[%s8 + $0x18] sm:$0xff]
    %v163 = vld [vmem:[%s9] sm:$0x1]
    %v165 = vperm.slane %v163, 0
    %167 = vmatpush.msra.mxu0 0.0
    %168 = vmatpush.msra.mxu0 0.0
    %169 = vmatpush.msra.mxu0 0.0
    %170 = vmatpush.msra.mxu0 0.0
    %171 = vmatpush.msra.mxu0 0.0
    %172 = vmatpush.msra.mxu0 0.0
    %173 = vmatpush.msra.mxu0 0.0
    %174 = vmatpush.msra.mxu0 0.0
    %175 = vmatpush.msra.mxu0 0.0
    %176 = vmatpush.msra.mxu0 0.0
    %177 = vmatpush.msra.mxu0 0.0
    %178 = vmatpush.msra.mxu0 0.0
    %179 = vmatpush.msra.mxu0 %v162
    %180 = vmatpush.msra.mxu0 %v161
    %181 = vmatpush.msra.mxu0 %v160
    %182 = vmatpush.msra.mxu0 %v159
    %183 = vmatmul.f32.gmra.mxu0 %v137
    %v184 = vpop.f32.mrf.mxu0
    %v185 = vadd.f32 %v165, %v184
    %186 = vdwg.mxu0
    %v187 = vmax.f32 %v185, 0.0
    %v188 = vand.u32 2147483647, %v185
    %v189 = vsub.f32 0.0, %v188
    %v190 = vmul.f32 %v189, 1.442695
    %v191 = vpow.pop %v190
    %v192 = vadd.f32 %v191, 1.0
    %v193 = vlog2.pop %v192
    %v194 = vmul.f32 %v193, 0.6931472
    %v195 = vmul.f32 -0.5, %v191
    %v196 = vadd.f32 %v195, 1.0
    %v197 = vmul.f32 %v196, %v191
    %v198 = vand.u32 2147483647, %v191
    %vm199 = vcmp.lt.f32.partialorder %v198, 0.0004427343
    %v200 = vsel %vm199, %v197, %v194
    %v201 = vadd.f32 %v187, %v200
    %v202 = vadd.f32 %v201, 1e-06
    %203 = vst [vmem:[#allocation4] sm:$0xf] %v157
    %204 = vst [vmem:[#allocation6] sm:$0xf] %v202
    %v205 = vld [vmem:[%s1] sm:$0xf]
    %v206 = vmul.f32 %v202, %v205
    %v207 = vadd.f32 %v157, %v206
    %v208 = vld [vmem:[%s10] sm:$0xff]
    %v209 = vld [vmem:[%s10 + $0x8] sm:$0xff]
    %v210 = vld [vmem:[%s10 + $0x10] sm:$0xff]
    %v211 = vld [vmem:[%s10 + $0x18] sm:$0xff]
    %v212 = vld [vmem:[%s10 + $0x20] sm:$0xff]
    %v213 = vld [vmem:[%s10 + $0x28] sm:$0xff]
    %v214 = vld [vmem:[%s10 + $0x30] sm:$0xff]
    %v215 = vld [vmem:[%s10 + $0x38] sm:$0xff]
    %v216 = vld [vmem:[%s10 + $0x40] sm:$0xff]
    %v217 = vld [vmem:[%s10 + $0x48] sm:$0xff]
    %v218 = vld [vmem:[%s10 + $0x50] sm:$0xff]
    %v219 = vld [vmem:[%s10 + $0x58] sm:$0xff]
    %v220 = vld [vmem:[%s10 + $0x60] sm:$0xff]
    %v221 = vld [vmem:[%s10 + $0x68] sm:$0xff]
    %v222 = vld [vmem:[%s10 + $0x70] sm:$0xff]
    %v223 = vld [vmem:[%s10 + $0x78] sm:$0xff]
    %v224 = vld [vmem:[%s11] sm:$0x1]
    %v226 = vperm.slane %v224, 0
    %228 = vmatpush.msra.mxu0 %v223
    %229 = vmatpush.msra.mxu0 %v222
    %230 = vmatpush.msra.mxu0 %v221
    %231 = vmatpush.msra.mxu0 %v220
    %232 = vmatpush.msra.mxu0 %v219
    %233 = vmatpush.msra.mxu0 %v218
    %234 = vmatpush.msra.mxu0 %v217
    %235 = vmatpush.msra.mxu0 %v216
    %236 = vmatpush.msra.mxu0 %v215
    %237 = vmatpush.msra.mxu0 %v214
    %238 = vmatpush.msra.mxu0 %v213
    %239 = vmatpush.msra.mxu0 %v212
    %240 = vmatpush.msra.mxu0 %v211
    %241 = vmatpush.msra.mxu0 %v210
    %242 = vmatpush.msra.mxu0 %v209
    %243 = vmatpush.msra.mxu0 %v208
    %244 = vmatmul.f32.gmra.mxu0 %v207
    %v245 = vpop.f32.mrf.mxu0
    %v246 = vadd.f32 %v226, %v245
    %247 = vdwg.mxu0
    %v248 = vmax.f32 %v246, 0.0
    %v249 = vld [vmem:[%s12] sm:$0xff]
    %v250 = vld [vmem:[%s12 + $0x8] sm:$0xff]
    %v251 = vld [vmem:[%s12 + $0x10] sm:$0xff]
    %v252 = vld [vmem:[%s12 + $0x18] sm:$0xff]
    %v253 = vld [vmem:[%s13] sm:$0x1]
    %v255 = vperm.slane %v253, 0
    %v258 = vsel %vm135, %v248, 0
    %260 = vmatpush.msra.mxu0 0.0
    %261 = vmatpush.msra.mxu0 0.0
    %262 = vmatpush.msra.mxu0 0.0
    %263 = vmatpush.msra.mxu0 0.0
    %264 = vmatpush.msra.mxu0 0.0
    %265 = vmatpush.msra.mxu0 0.0
    %266 = vmatpush.msra.mxu0 0.0
    %267 = vmatpush.msra.mxu0 0.0
    %268 = vmatpush.msra.mxu0 0.0
    %269 = vmatpush.msra.mxu0 0.0
    %270 = vmatpush.msra.mxu0 0.0
    %271 = vmatpush.msra.mxu0 0.0
    %272 = vmatpush.msra.mxu0 %v252
    %273 = vmatpush.msra.mxu0 %v251
    %274 = vmatpush.msra.mxu0 %v250
    %275 = vmatpush.msra.mxu0 %v249
    %276 = vmatmul.f32.gmra.mxu0 %v258
    %v277 = vpop.f32.mrf.mxu0
    %v278 = vadd.f32 %v255, %v277
    %279 = vdwg.mxu0
    %v280 = vmax.f32 %v278, 0.0
    %v281 = vld [vmem:[%s14] sm:$0xff]
    %v282 = vld [vmem:[%s14 + $0x8] sm:$0xff]
    %v283 = vld [vmem:[%s14 + $0x10] sm:$0xff]
    %v284 = vld [vmem:[%s14 + $0x18] sm:$0xff]
    %v285 = vld [vmem:[%s14 + $0x20] sm:$0xff]
    %v286 = vld [vmem:[%s14 + $0x28] sm:$0xff]
    %v287 = vld [vmem:[%s14 + $0x30] sm:$0xff]
    %v288 = vld [vmem:[%s14 + $0x38] sm:$0xff]
    %v289 = vld [vmem:[%s15] sm:$0x1]
    %v291 = vperm.slane %v289, 0
    %v294 = vsel %vm102, %v280, 0
    %296 = vmatpush.msra.mxu0 0.0
    %297 = vmatpush.msra.mxu0 0.0
    %298 = vmatpush.msra.mxu0 0.0
    %299 = vmatpush.msra.mxu0 0.0
    %300 = vmatpush.msra.mxu0 0.0
    %301 = vmatpush.msra.mxu0 0.0
    %302 = vmatpush.msra.mxu0 0.0
    %303 = vmatpush.msra.mxu0 0.0
    %304 = vmatpush.msra.mxu0 %v288
    %305 = vmatpush.msra.mxu0 %v287
    %306 = vmatpush.msra.mxu0 %v286
    %307 = vmatpush.msra.mxu0 %v285
    %308 = vmatpush.msra.mxu0 %v284
    %309 = vmatpush.msra.mxu0 %v283
    %310 = vmatpush.msra.mxu0 %v282
    %311 = vmatpush.msra.mxu0 %v281
    %312 = vmatmul.f32.gmra.mxu0 %v294
    %v313 = vpop.f32.mrf.mxu0
    %v314 = vadd.f32 %v291, %v313
    %315 = vdwg.mxu0
    %v316 = vmax.f32 %v314, 1e-06
    %v317 = vmin.f32 %v316, 0.999999
    %318 = vst [vmem:[#allocation2] sm:$0xf] %v317
    // Predicated region
    $region66: #{tpu_custom_call.1} parent=1 // pred_check
      _
    $region67: #{tpu_custom_call.1} parent=1 // pred_check_branch
      %320 = sbr.rel (0) target = $region69
    $region68: #{tpu_custom_call.1} parent=1 // pred_region
      %322 = vsyncadd [#allocation3], 0
      %s324 = sshll.u32 [#allocation2], 4
      %s325 = int_to_ptr.vmem [resolvable:$true] %s324
      %s326 = sshll.u32 %s16, 4
      %s327 = int_to_ptr.hbm [resolvable:$true] %s326
      %329 = dma.vmem_to_hbm [thread:$0]  %s325, 64, %s327, [#allocation3]
    $region69: #{tpu_custom_call.1} parent=1 // pred_fallthru
      _
    // Predicated region
    $region70: #{tpu_custom_call.1} parent=1 // pred_check
      _
    $region71: #{tpu_custom_call.1} parent=1 // pred_check_branch
      %331 = sbr.rel (0) target = $region73
    $region72: #{tpu_custom_call.1} parent=1 // pred_region
      %333 = vsyncadd [#allocation5], 0
      %s335 = sshll.u32 [#allocation4], 4
      %s336 = int_to_ptr.vmem [resolvable:$true] %s335
      %s337 = sshll.u32 %s17, 4
      %s338 = int_to_ptr.hbm [resolvable:$true] %s337
      %340 = dma.vmem_to_hbm [thread:$0]  %s336, 64, %s338, [#allocation5]
    $region73: #{tpu_custom_call.1} parent=1 // pred_fallthru
      _
    // Predicated region
    $region74: #{tpu_custom_call.1} parent=1 // pred_check
      _
    $region75: #{tpu_custom_call.1} parent=1 // pred_check_branch
      %342 = sbr.rel (0) target = $region77
    $region76: #{tpu_custom_call.1} parent=1 // pred_region
      %344 = vsyncadd [#allocation5], 0
      %s346 = sshll.u32 [#allocation6], 4
      %s347 = int_to_ptr.vmem [resolvable:$true] %s346
      %s348 = sshll.u32 %s18, 4
      %s349 = int_to_ptr.hbm [resolvable:$true] %s348
      %351 = dma.vmem_to_hbm [thread:$0]  %s347, 64, %s349, [#allocation5]
    $region77: #{tpu_custom_call.1} parent=1 // pred_fallthru
      _
    // Predicated region
    $region78: #{tpu_custom_call.1} parent=1 // pred_check
      _
    $region79: #{tpu_custom_call.1} parent=1 // pred_check_branch
      %353 = sbr.rel (0) target = $region81
    $region80: #{tpu_custom_call.1} parent=1 // pred_region
      %355 = dma.done [#allocation3], 64
    $region81: #{tpu_custom_call.1} parent=1 // pred_fallthru
      _
    // Predicated region
    $region82: #{tpu_custom_call.1} parent=1 // pred_check
      _
    $region83: #{tpu_custom_call.1} parent=1 // pred_check_branch
      %357 = sbr.rel (0) target = $region85
    $region84: #{tpu_custom_call.1} parent=1 // pred_region
      %359 = dma.done [#allocation5], 64
    $region85: #{tpu_custom_call.1} parent=1 // pred_fallthru
      _
    // Predicated region
    $region86: #{tpu_custom_call.1} parent=1 // pred_check
      _
    $region87: #{tpu_custom_call.1} parent=1 // pred_check_branch
      %361 = sbr.rel (0) target = $region89
    $region88: #{tpu_custom_call.1} parent=1 // pred_region
      %363 = dma.done [#allocation5], 64
    $region89: #{tpu_custom_call.1} parent=1 // pred_fallthru
      _
    %364 = vsyncpa [#allocation3], 1
    %365 = vsyncpa [#allocation5], 1

</llo_original>
